<compile_context>
chip_gen: v6e
topology: v6e:2x2x1
jax: 0.10.0
libtpu: 0.0.40
codegen_flags: <defaults>
</compile_context>

<pallas_src>
import functools

import numpy as np

import jax
import jax.numpy as jnp
from jax.experimental import pallas as pl
from jax.experimental.pallas import tpu as pltpu

_JOINT_DIM = 17 * 3  # 51


def _round_up(a, m):
    return -(-a // m) * m


def _v_loss_kernel(x_ref, o_ref, *, n_frames, tile):
    """Tile i owns centers j = i*tile + 1 + r, r = 0 .. tile-9 (stencil fully
    inside the tile).  Writes an (8, 51) f32 partial sum of squared errors."""
    i = pl.program_id(0)
    T = tile
    R = T - 8                                    # centers owned by this tile

    a = x_ref[0:R, :].astype(jnp.float32)        # frame j-1
    b = x_ref[1:R + 1, :].astype(jnp.float32)    # frame j   (target)
    c = x_ref[2:R + 2, :].astype(jnp.float32)    # frame j+1
    diff = (a + c) * 0.5 - b
    sq = diff * diff                             # (R, 51) f32

    def _fold(v):
        # (R, 51) -> (8, 51): pure element-wise vreg adds (R is a multiple of 8).
        return v.reshape(R // 8, 8, _JOINT_DIM).sum(axis=0)

    # Only tiles whose owned centers / touched frames run past the end of the
    # input need the validity mask; interior tiles take the unmasked fast path.
    needs_mask = (i + 1) * T > n_frames + 6

    @pl.when(jnp.logical_not(needs_mask))
    def _():
        o_ref[...] = _fold(sq)

    @pl.when(needs_mask)
    def _():
        j = i * T + 1 + jax.lax.broadcasted_iota(jnp.int32, sq.shape, 0)
        # where() also squashes any NaN/garbage read from the ragged tail.
        o_ref[...] = _fold(jnp.where(j <= n_frames - 2, sq, 0.0))


def v_loss(x, *, frame_tile=8192):
    """x: any array reshapeable to (-1, 17, 3).  Returns the scalar MSE loss.

    frame_tile: frames per grid step (multiple of 8, >= 16).  Default 8192;
    keep <= ~16384 for f32 inputs (VMEM double-buffering headroom on v7x).
    """
    assert frame_tile % 8 == 0 and frame_tile >= 16
    x = jnp.asarray(x)
    if x.dtype not in (jnp.float16, jnp.bfloat16):
        x = x.astype(jnp.float32)
    x2 = x.reshape(-1, _JOINT_DIM)               # (B, 51): frames on rows
    B = x2.shape[0]
    assert B >= 3, "v_loss needs at least 3 frames"

    # Tile size: as large as requested, but split into >= 2 tiles when possible
    # (v7x has 2 TensorCores) and at least 16 frames so a tile owns >= 8 centers.
    T = min(frame_tile, _round_up(pl.cdiv(B, 2), 8))
    T = max(T, 16)
    x_in = jnp.pad(x2, ((0, T - B), (0, 0))) if B < T else x2   # tiny-B only
    G = pl.cdiv(x_in.shape[0], T)

    kernel = functools.partial(_v_loss_kernel, n_frames=B, tile=T)

    grid_spec = pltpu.PrefetchScalarGridSpec(
        num_scalar_prefetch=0,
        grid=(G,),
        in_specs=[pl.BlockSpec((T, _JOINT_DIM), lambda i: (i, 0))],
        out_specs=pl.BlockSpec((8, _JOINT_DIM), lambda i: (i, 0)),
    )

    cost = pl.CostEstimate(
        flops=5 * _JOINT_DIM * max(B - 2, 1),
        transcendentals=0,
        bytes_accessed=int(x_in.size * x_in.dtype.itemsize
                           + G * 8 * _JOINT_DIM * 4),
    )

    partials = pl.pallas_call(
        kernel,
        out_shape=jax.ShapeDtypeStruct((G * 8, _JOINT_DIM), jnp.float32),
        grid_spec=grid_spec,
        compiler_params=pltpu.CompilerParams(
            dimension_semantics=("parallel",),     # lets v7x split tiles over 2 TCs
            vmem_limit_bytes=32 * 1024 * 1024,     # explicit; safe on v5e/v6e/v7x
        ),
        cost_estimate=cost,
    )(x_in)

    total = jnp.sum(partials)

    # Cross-tile-boundary centers (the last 8 center slots of every tile): at most
    # 8*G rows, summed directly in JAX with static (trace-time) indices.
    js_np = np.arange(1, B - 1, dtype=np.int32)
    js_np = js_np[((js_np - 1) % T) >= (T - 8)]
    if js_np.size:
        js = jnp.asarray(js_np)
        ea = x2[js - 1].astype(jnp.float32)
        eb = x2[js].astype(jnp.float32)
        ec = x2[js + 1].astype(jnp.float32)
        ed = (ea + ec) * 0.5 - eb
        total = total + jnp.sum(ed * ed)

    return total / jnp.float32((B - 2) * _JOINT_DIM)


def _v_loss_ref(x):
    """Pure-JAX reference matching the PyTorch module."""
    x = jnp.asarray(x, dtype=jnp.float32).reshape(-1, 17, 3)
    mean_coo = (x[:-2] + x[2:]) * 0.5
    return jnp.mean((mean_coo - x[1:-1]) ** 2)


if __name__ == "__main__":
    key = jax.random.PRNGKey(0)
    k1, k2 = jax.random.split(key)

    # Small shape implied by the module: B frames of 17 joints x 3 coords.
    x_small = jax.random.normal(k1, (8, 17, 3), dtype=jnp.float32)
    got = jax.block_until_ready(v_loss(x_small))
    want = jax.block_until_ready(_v_loss_ref(x_small))
    assert jnp.allclose(got, want, rtol=1e-4, atol=1e-6), (got, want)

    # Multi-tile paths: interior (unmasked) tiles, ragged masked last tile and the
    # wrapper-side cross-tile-boundary centers.
    x_big = jax.random.normal(k2, (600, 17, 3), dtype=jnp.float32)
    want_b = jax.block_until_ready(_v_loss_ref(x_big))
    got_b = jax.block_until_ready(v_loss(x_big))                    # T=304, 2 tiles
    got_c = jax.block_until_ready(v_loss(x_big, frame_tile=128))    # 5 tiles
    assert jnp.allclose(got_b, want_b, rtol=1e-4, atol=1e-6), (got_b, want_b)
    assert jnp.allclose(got_c, want_b, rtol=1e-4, atol=1e-6), (got_c, want_b)

    print("KERNEL_OK")
</pallas_src>

<mosaic_0001>
module attributes {stable_mosaic.version = 11 : i64} {
  func.func @_v_loss_kernel(%arg0: i32, %arg1: memref<16x51xf32, #tpu.memory_space<vmem>>, %arg2: memref<8x51xf32, #tpu.memory_space<vmem>>) attributes {dimension_semantics = [#tpu.dimension_semantics<parallel>], iteration_bounds = array<i64: 1>, scalar_prefetch = 0 : i64, scratch_operands = 0 : i64, tpu.core_type = #tpu.core_type<tc>, window_params = [{transform_indices = @transform_0, window_bounds = array<i64: 16, 51>}, {transform_indices = @transform_1, window_bounds = array<i64: 8, 51>}]} {
    %c0 = arith.constant 0 : index
    %c0_0 = arith.constant 0 : index
    %0 = vector.load %arg1[%c0, %c0_0] : memref<16x51xf32, #tpu.memory_space<vmem>>, vector<8x51xf32>
    %c1 = arith.constant 1 : index
    %c0_1 = arith.constant 0 : index
    %1 = vector.load %arg1[%c1, %c0_1] : memref<16x51xf32, #tpu.memory_space<vmem>>, vector<8x51xf32>
    %c2 = arith.constant 2 : index
    %c0_2 = arith.constant 0 : index
    %2 = vector.load %arg1[%c2, %c0_2] : memref<16x51xf32, #tpu.memory_space<vmem>>, vector<8x51xf32>
    %3 = arith.addf %0, %2 : vector<8x51xf32>
    %cst = arith.constant 5.000000e-01 : f32
    %4 = vector.broadcast %cst : f32 to vector<8x51xf32>
    %5 = arith.mulf %3, %4 : vector<8x51xf32>
    %6 = arith.subf %5, %1 : vector<8x51xf32>
    %7 = arith.mulf %6, %6 : vector<8x51xf32>
    %c1_i32 = arith.constant 1 : i32
    %8 = arith.addi %arg0, %c1_i32 : i32
    %c16_i32 = arith.constant 16 : i32
    %9 = arith.muli %8, %c16_i32 : i32
    %c14_i32 = arith.constant 14 : i32
    %10 = arith.cmpi sgt, %9, %c14_i32 : i32
    %true = arith.constant true
    %11 = arith.xori %10, %true : i1
    %12 = arith.extui %11 : i1 to i32
    %c0_i32 = arith.constant 0 : i32
    %13 = arith.cmpi ne, %12, %c0_i32 : i32
    scf.if %13 {
      %16 = vector.shape_cast %7 : vector<8x51xf32> to vector<1x8x51xf32>
      %cst_4 = arith.constant dense<0.000000e+00> : vector<8x51xf32>
      %17 = vector.multi_reduction <add>, %16, %cst_4 [0] : vector<1x8x51xf32> to vector<8x51xf32>
      %c0_5 = arith.constant 0 : index
      %c0_6 = arith.constant 0 : index
      %18 = vector.load %arg2[%c0_5, %c0_6] : memref<8x51xf32, #tpu.memory_space<vmem>>, vector<8x51xf32>
      tpu.vector_store %arg2[%c0_5, %c0_6], %17 {strides = array<i32>} : memref<8x51xf32, #tpu.memory_space<vmem>>, vector<8x51xf32>,
    } else {
    }
    %14 = arith.extui %10 : i1 to i32
    %c0_i32_3 = arith.constant 0 : i32
    %15 = arith.cmpi ne, %14, %c0_i32_3 : i32
    scf.if %15 {
      %c16_i32_4 = arith.constant 16 : i32
      %16 = arith.muli %arg0, %c16_i32_4 : i32
      %c1_i32_5 = arith.constant 1 : i32
      %17 = arith.addi %16, %c1_i32_5 : i32
      %18 = tpu.iota {dimensions = array<i32: 0>} : vector<8x51xi32>
      %19 = vector.broadcast %17 : i32 to vector<8x51xi32>
      %20 = arith.addi %19, %18 : vector<8x51xi32>
      %c6_i32 = arith.constant 6 : i32
      %21 = vector.broadcast %c6_i32 : i32 to vector<8x51xi32>
      %22 = arith.cmpi sle, %20, %21 : vector<8x51xi32>
      %cst_6 = arith.constant 0.000000e+00 : f32
      %23 = vector.broadcast %cst_6 : f32 to vector<8x51xf32>
      %24 = arith.select %22, %7, %23 : vector<8x51xi1>, vector<8x51xf32>
      %25 = vector.shape_cast %24 : vector<8x51xf32> to vector<1x8x51xf32>
      %cst_7 = arith.constant dense<0.000000e+00> : vector<8x51xf32>
      %26 = vector.multi_reduction <add>, %25, %cst_7 [0] : vector<1x8x51xf32> to vector<8x51xf32>
      %c0_8 = arith.constant 0 : index
      %c0_9 = arith.constant 0 : index
      %27 = vector.load %arg2[%c0_8, %c0_9] : memref<8x51xf32, #tpu.memory_space<vmem>>, vector<8x51xf32>
      tpu.vector_store %arg2[%c0_8, %c0_9], %26 {strides = array<i32>} : memref<8x51xf32, #tpu.memory_space<vmem>>, vector<8x51xf32>,
    } else {
    }
    return
  }
  func.func @transform_0(%arg0: i32) -> (i32, i32) {
    %c0_i32 = arith.constant 0 : i32
    %c0_i32_0 = arith.constant 0 : i32
    return %arg0, %c0_i32 : i32, i32
  }
  func.func @transform_1(%arg0: i32) -> (i32, i32) {
    %c0_i32 = arith.constant 0 : i32
    %c0_i32_0 = arith.constant 0 : i32
    return %arg0, %c0_i32 : i32, i32
  }
}

</mosaic_0001>

<llo_original>
// kernel: tpu_custom_call.1
$region0: #{tpu_custom_call.1}
  #allocation0 [shape = 'u32[]', space=smem, size = 0x4, offset = 0x4, fixed_abs, tag = 'smem constant byte address 0x4 - core index']
  #allocation1 [shape = 'u32[144,128]{1,0:T(1,128)}', space=vmem, size = 0x12000, scoped, tag = 'internal scratch']
  %s0 = inlined_call_operand.hbm [shape: f32[16,51], index: 0, kind: input, shape index: {}]
  %s1 = inlined_call_operand.hbm [shape: f32[8,51], index: 1, kind: output, shape index: {}]
  %s2 = sld [smem:[#allocation0]]
  $region26: #{tpu_custom_call.1} parent=0
    _
  %s4 = ssub.s32 1, %s2
  %s5 = scalar_select 0, %s4, %s2
  $region1: #{tpu_custom_call.1} parent=0
    #allocation2 [shape = 'u8[8192]{0}', space=vmem, size = 0x2000, scoped, tag = 'input window, operand 0, single buffered']
    #allocation3 [shape = 's32[1]{0}', space=sflag, size = 0x4, scoped, tag = 'scoped memory for tpu_custom_call.1']
    #allocation4 [shape = 's32[1]{0}', space=sflag, size = 0x4, scoped, tag = 'scoped memory for tpu_custom_call.1']
    #allocation5 [shape = 'u8[4096]{0}', space=vmem, size = 0x1000, scoped, tag = 'output window, operand 0, single buffered']
    %6 = vsyncpa [#allocation3], 0
    %7 = vsyncpa [#allocation4], 0
    // Predicated region
    $region2: #{tpu_custom_call.1} parent=1 // pred_check
      _
    $region3: #{tpu_custom_call.1} parent=1 // pred_check_branch
      %9 = sbr.rel (0) target = $region5
    $region4: #{tpu_custom_call.1} parent=1 // pred_region
      %s11 = ssub.s32 256, 256
      %12 = vsyncadd [#allocation3], %s11
      %s13 = sshll.u32 [#allocation2], 4
      %s14 = int_to_ptr.vmem [resolvable:$true] %s13
      %19 = dma.hbm_to_vmem [thread:$0]  %s0, 256, %s14, [#allocation3], 128, 128, 8
    $region5: #{tpu_custom_call.1} parent=1 // pred_fallthru
      _
    // Predicated region
    $region6: #{tpu_custom_call.1} parent=1 // pred_check
      _
    $region7: #{tpu_custom_call.1} parent=1 // pred_check_branch
      %21 = sbr.rel (0) target = $region9
    $region8: #{tpu_custom_call.1} parent=1 // pred_region
      %22 = dma.done [#allocation3], 256
    $region9: #{tpu_custom_call.1} parent=1 // pred_fallthru
      _
    %v23 = vld [vmem:[#allocation2] sm:$0xff]
    %v24 = vld [vmem:[#allocation2 + $0x1] sm:$0xff]
    %v25 = vld [vmem:[#allocation2 + $0x2] sm:$0xff]
    %v26 = vadd.f32 %v23, %v25
    %v27 = vmul.f32 %v26, 0.5
    %v28 = vsub.f32 %v27, %v24
    %v29 = vmul.f32 %v28, %v28
    %s30 = sadd.s32 0, 1
    %s31 = smul.u32 %s30, 16
    %p32 = scmp.gt.s32.totalorder %s31, 14
    %p33 = scmp.le.s32.totalorder %s31, 14
    // Predicated region
    $region10: #{tpu_custom_call.1} parent=1 // pred_check
      %p34 = pneg %p33
    $region11: #{tpu_custom_call.1} parent=1 // pred_check_branch
      %36 = sbr.rel (%p34) target = $region13
    $region12: #{tpu_custom_call.1} parent=1 // pred_region
      %v37 = vadd.f32 %v29, 0.0
      %vm38 = vcmask 416768
      %39 = vst.msk [vmem:[#allocation5] sm:$0xff] %vm38, %v37
    $region13: #{tpu_custom_call.1} parent=1 // pred_fallthru
      _
    // Predicated region
    $region14: #{tpu_custom_call.1} parent=1 // pred_check
      %p40 = pneg %p32
    $region15: #{tpu_custom_call.1} parent=1 // pred_check_branch
      %42 = sbr.rel (%p40) target = $region17
    $region16: #{tpu_custom_call.1} parent=1 // pred_region
      %s43 = smul.u32 0, 16
      %s44 = sadd.s32 %s43, 1
      %v45 = vlaneseq
      %v46 = vshrl.u32 %v45, 7
      %v47 = vstv %s44
      %v48 = vadd.s32 %v47, %v46
      %vm49 = vcmp.le.s32.totalorder %v48, 6
      %v50 = vsel %vm49, %v29, 0.0
      %v51 = vadd.f32 %v50, 0.0
      %vm52 = vcmask 416768
      %53 = vst.msk [vmem:[#allocation5] sm:$0xff] %vm52, %v51
    $region17: #{tpu_custom_call.1} parent=1 // pred_fallthru
      _
    // Predicated region
    $region18: #{tpu_custom_call.1} parent=1 // pred_check
      _
    $region19: #{tpu_custom_call.1} parent=1 // pred_check_branch
      %55 = sbr.rel (0) target = $region21
    $region20: #{tpu_custom_call.1} parent=1 // pred_region
      %s57 = ssub.s32 128, 128
      %58 = vsyncadd [#allocation4], %s57
      %s60 = sshll.u32 [#allocation5], 4
      %s61 = int_to_ptr.vmem [resolvable:$true] %s60
      %63 = dma.vmem_to_hbm [thread:$0]  %s61, 128, %s1, [#allocation4]
    $region21: #{tpu_custom_call.1} parent=1 // pred_fallthru
      _
    // Predicated region
    $region22: #{tpu_custom_call.1} parent=1 // pred_check
      _
    $region23: #{tpu_custom_call.1} parent=1 // pred_check_branch
      %65 = sbr.rel (0) target = $region25
    $region24: #{tpu_custom_call.1} parent=1 // pred_region
      %66 = dma.done [#allocation4], 128
    $region25: #{tpu_custom_call.1} parent=1 // pred_fallthru
      _
    %67 = vsyncpa [#allocation3], 1
    %68 = vsyncpa [#allocation4], 1

</llo_original>
